<compile_context>
chip_gen: v6e
topology: v6e:2x2x1
jax: 0.10.0
libtpu: 0.0.40
codegen_flags: <defaults>
</compile_context>

<pallas_src>
import math
import functools

import jax
import jax.numpy as jnp
from jax.experimental import pallas as pl
from jax.experimental.pallas import tpu as pltpu

LEAKY_SLOPE = 0.2
BN_EPS = 1e-5


def _conv_act(x, w_ref, b_ref, *, K, pad):
    """Conv1d ('same', zero pad) + bias + LeakyReLU(0.2) on one (C, L) slab.

    x     : (C_in, L) f32 value (channels on sublanes, length on lanes).
    w_ref : (C_out, K*C_in) VMEM ref; column j = k*C_in + ci holds w[:, ci, k].
    b_ref : (C_out, 1) VMEM ref.
    """
    C, L = x.shape
    lane = jax.lax.broadcasted_iota(jnp.int32, (C, L), 1)
    acc = jnp.zeros((C, L), jnp.float32)
    for k in range(K):                               # static: K is tiny (3)
        d = k - pad                                  # tap offset along L
        if d == 0:
            xs = x
        else:
            # xs[c, l] = x[c, l + d], zero outside [0, L)  ('same' zero padding).
            xs = pltpu.roll(x, shift=(-d) % L, axis=1)       # XLU rotate, no copy
            valid = (lane + d >= 0) & (lane + d < L)
            xs = jnp.where(valid, xs, 0.0)
        for ci in range(C):                          # static: small-C VPU path
            j = k * C + ci
            w_col = w_ref[:, j:j + 1]                # (C_out, 1) weight column
            acc = acc + w_col * xs[ci:ci + 1, :]     # outer-product FMA on VPU
    acc = acc + b_ref[...]                           # (C,1) bias, hoisted once
    return jnp.where(acc > 0.0, acc, LEAKY_SLOPE * acc)      # LeakyReLU(0.2)


def _stats_kernel(x_ref, w_ref, b_ref, sum_ref, sq_ref, *, K, pad):
    # Accumulate per-channel sum / sum-of-squares of the activated conv output.
    @pl.when(pl.program_id(0) == 0)
    def _():
        sum_ref[...] = jnp.zeros_like(sum_ref)
        sq_ref[...] = jnp.zeros_like(sq_ref)

    act = _conv_act(x_ref[0], w_ref, b_ref, K=K, pad=pad)    # (C, L)
    sum_ref[...] += jnp.sum(act, axis=1, keepdims=True)      # (C, 1)
    sq_ref[...] += jnp.sum(act * act, axis=1, keepdims=True)  # (C, 1)


def _norm_kernel(x_ref, w_ref, b_ref, scale_ref, shift_ref, out_ref, *, K, pad):
    x = x_ref[0]                                             # (C, L)
    act = _conv_act(x, w_ref, b_ref, K=K, pad=pad)
    # TODO(synk): dropout is identity (eval mode); train-mode random mask not replicated.
    out_ref[0] = x + act * scale_ref[...] + shift_ref[...]   # BN affine + residual


@functools.partial(jax.jit, static_argnames=("kernel_size",))
def discriminator_block(x, w, b, gamma, beta, kernel_size=3):
    """x: (N, C, L) float32, PyTorch Conv1d layout. Returns (N, C, L)."""
    N, C, L = x.shape
    K = kernel_size
    pad = (K - 1) // 2

    x = x.astype(jnp.float32)
    # (C_out, C_in, K) -> (C_out, K*C_in); column j = k*C_in + ci  (tiny array).
    w2 = jnp.transpose(w, (0, 2, 1)).reshape(C, K * C).astype(jnp.float32)
    b2 = b.reshape(C, 1).astype(jnp.float32)

    x_spec = pl.BlockSpec((1, C, L), lambda n: (n, 0, 0))    # one batch row / step
    w_spec = pl.BlockSpec((C, K * C), lambda n: (0, 0))
    v_spec = pl.BlockSpec((C, 1), lambda n: (0, 0))
    s_spec = pl.BlockSpec((C, 1), lambda n: (0, 0))          # resident accumulator

    # ---- pass 1: per-channel batch statistics of conv + LeakyReLU output ----
    ssum, ssq = pl.pallas_call(
        functools.partial(_stats_kernel, K=K, pad=pad),
        out_shape=(jax.ShapeDtypeStruct((C, 1), jnp.float32),
                   jax.ShapeDtypeStruct((C, 1), jnp.float32)),
        grid=(N,),
        in_specs=[x_spec, w_spec, v_spec],
        out_specs=(s_spec, s_spec),
        compiler_params=pltpu.CompilerParams(
            dimension_semantics=("arbitrary",)),             # N is the BN reduction axis
    )(x, w2, b2)

    # ---- O(C) glue: BatchNorm1d train-mode scale/shift (biased variance) ----
    inv_count = 1.0 / float(N * L)
    mean = ssum[:, 0] * inv_count
    # TODO(synk): E[x^2]-mean^2 in f32 (clamped at 0); use Welford for extreme value ranges.
    var = jnp.maximum(ssq[:, 0] * inv_count - mean * mean, 0.0)
    scale = gamma.astype(jnp.float32) * jax.lax.rsqrt(var + BN_EPS)
    shift = beta.astype(jnp.float32) - mean * scale
    # TODO(synk): running_mean / running_var are not updated (stateless forward pass).

    # ---- pass 2: recompute conv+act, normalize, residual add ----
    out = pl.pallas_call(
        functools.partial(_norm_kernel, K=K, pad=pad),
        out_shape=jax.ShapeDtypeStruct((N, C, L), jnp.float32),
        grid=(N,),
        in_specs=[x_spec, w_spec, v_spec, v_spec, v_spec],
        out_specs=pl.BlockSpec((1, C, L), lambda n: (n, 0, 0)),
        compiler_params=pltpu.CompilerParams(
            dimension_semantics=("parallel",)),              # megacore on v7x
    )(x, w2, b2, scale.reshape(C, 1), shift.reshape(C, 1))
    return out


def _reference(x, w, b, gamma, beta, kernel_size=3):
    """Pure-JAX reference mirroring the PyTorch module (train-mode BN, eval dropout)."""
    pad = (kernel_size - 1) // 2
    out = jax.lax.conv_general_dilated(
        x, w, window_strides=(1,), padding=[(pad, pad)],
        dimension_numbers=("NCH", "OIH", "NCH"))
    out = out + b[None, :, None]
    out = jnp.where(out > 0, out, LEAKY_SLOPE * out)
    mean = jnp.mean(out, axis=(0, 2), keepdims=True)
    var = jnp.mean((out - mean) ** 2, axis=(0, 2), keepdims=True)
    out = (out - mean) * jax.lax.rsqrt(var + BN_EPS)
    out = out * gamma[None, :, None] + beta[None, :, None]
    return x + out


if __name__ == "__main__":
    N, C, L, K = 2, 4, 16, 3

    key = jax.random.PRNGKey(0)
    kx, kw, kb = jax.random.split(key, 3)

    x = jax.random.normal(kx, (N, C, L), dtype=jnp.float32)

    # Deterministic parameter init (PyTorch Conv1d default: U(-1/sqrt(Cin*K), +..))
    bound = 1.0 / math.sqrt(C * K)
    w = jax.random.uniform(kw, (C, C, K), minval=-bound, maxval=bound, dtype=jnp.float32)
    b = jax.random.uniform(kb, (C,), minval=-bound, maxval=bound, dtype=jnp.float32)
    gamma = jnp.ones((C,), jnp.float32)   # BatchNorm1d default affine params
    beta = jnp.zeros((C,), jnp.float32)

    out = discriminator_block(x, w, b, gamma, beta, kernel_size=K)
    out = jax.block_until_ready(out)

    ref = _reference(x, w, b, gamma, beta, kernel_size=K)
    assert out.shape == (N, C, L)
    assert jnp.allclose(out, ref, atol=1e-4, rtol=1e-4), "mismatch vs pure-JAX reference"

    print("KERNEL_OK")
</pallas_src>

<mosaic_0001>
module attributes {stable_mosaic.version = 11 : i64} {
  func.func @_stats_kernel(%arg0: i32, %arg1: memref<1x4x16xf32, #tpu.memory_space<vmem>>, %arg2: memref<4x12xf32, #tpu.memory_space<vmem>>, %arg3: memref<4x1xf32, #tpu.memory_space<vmem>>, %arg4: memref<4x1xf32, #tpu.memory_space<vmem>>, %arg5: memref<4x1xf32, #tpu.memory_space<vmem>>) attributes {dimension_semantics = [#tpu.dimension_semantics<arbitrary>], iteration_bounds = array<i64: 2>, scalar_prefetch = 0 : i64, scratch_operands = 0 : i64, tpu.core_type = #tpu.core_type<tc>, window_params = [{transform_indices = @transform_0, window_bounds = array<i64: 1, 4, 16>}, {pipeline_mode = #tpu.pipeline_mode<synchronous>, transform_indices = @transform_1, window_bounds = array<i64: 4, 12>}, {pipeline_mode = #tpu.pipeline_mode<synchronous>, transform_indices = @transform_2, window_bounds = array<i64: 4, 1>}, {pipeline_mode = #tpu.pipeline_mode<synchronous>, transform_indices = @transform_3, window_bounds = array<i64: 4, 1>}, {pipeline_mode = #tpu.pipeline_mode<synchronous>, transform_indices = @transform_4, window_bounds = array<i64: 4, 1>}]} {
    %c0_i32 = arith.constant 0 : i32
    %0 = arith.cmpi eq, %arg0, %c0_i32 : i32
    %1 = arith.extui %0 : i1 to i32
    %c0_i32_0 = arith.constant 0 : i32
    %2 = arith.cmpi ne, %1, %c0_i32_0 : i32
    scf.if %2 {
      %cst_38 = arith.constant 0.000000e+00 : f32
      %122 = vector.broadcast %cst_38 : f32 to vector<4x1xf32>
      %c0_39 = arith.constant 0 : index
      %c0_40 = arith.constant 0 : index
      %123 = vector.load %arg4[%c0_39, %c0_40] : memref<4x1xf32, #tpu.memory_space<vmem>>, vector<4x1xf32>
      tpu.vector_store %arg4[%c0_39, %c0_40], %122 {strides = array<i32>} : memref<4x1xf32, #tpu.memory_space<vmem>>, vector<4x1xf32>,
      %cst_41 = arith.constant 0.000000e+00 : f32
      %124 = vector.broadcast %cst_41 : f32 to vector<4x1xf32>
      %c0_42 = arith.constant 0 : index
      %c0_43 = arith.constant 0 : index
      %125 = vector.load %arg5[%c0_42, %c0_43] : memref<4x1xf32, #tpu.memory_space<vmem>>, vector<4x1xf32>
      tpu.vector_store %arg5[%c0_42, %c0_43], %124 {strides = array<i32>} : memref<4x1xf32, #tpu.memory_space<vmem>>, vector<4x1xf32>,
    } else {
    }
    %c0 = arith.constant 0 : index
    %c0_1 = arith.constant 0 : index
    %c0_2 = arith.constant 0 : index
    %3 = vector.load %arg1[%c0, %c0_1, %c0_2] : memref<1x4x16xf32, #tpu.memory_space<vmem>>, vector<1x4x16xf32>
    %4 = vector.shape_cast %3 : vector<1x4x16xf32> to vector<4x16xf32>
    %5 = tpu.iota {dimensions = array<i32: 1>} : vector<4x16xi32>
    %cst = arith.constant 0.000000e+00 : f32
    %6 = vector.broadcast %cst : f32 to vector<4x16xf32>
    %c1_i32 = arith.constant 1 : i32
    %7 = tpu.dynamic_rotate %4 by %c1_i32 dim 1 : vector<4x16xf32>, i32 -> vector<4x16xf32>
    %c-1_i32 = arith.constant -1 : i32
    %8 = vector.broadcast %c-1_i32 : i32 to vector<4x16xi32>
    %9 = arith.addi %5, %8 : vector<4x16xi32>
    %c0_i32_3 = arith.constant 0 : i32
    %10 = vector.broadcast %c0_i32_3 : i32 to vector<4x16xi32>
    %11 = arith.cmpi sge, %9, %10 : vector<4x16xi32>
    %c-1_i32_4 = arith.constant -1 : i32
    %12 = vector.broadcast %c-1_i32_4 : i32 to vector<4x16xi32>
    %13 = arith.addi %5, %12 : vector<4x16xi32>
    %c16_i32 = arith.constant 16 : i32
    %14 = vector.broadcast %c16_i32 : i32 to vector<4x16xi32>
    %15 = arith.cmpi slt, %13, %14 : vector<4x16xi32>
    %16 = arith.andi %11, %15 : vector<4x16xi1>
    %cst_5 = arith.constant 0.000000e+00 : f32
    %17 = vector.broadcast %cst_5 : f32 to vector<4x16xf32>
    %18 = arith.select %16, %7, %17 : vector<4x16xi1>, vector<4x16xf32>
    %c0_6 = arith.constant 0 : index
    %c0_7 = arith.constant 0 : index
    %19 = vector.load %arg2[%c0_6, %c0_7] : memref<4x12xf32, #tpu.memory_space<vmem>>, vector<4x1xf32>
    %20 = vector.extract_strided_slice %18 {offsets = [0, 0], sizes = [1, 16], strides = [1, 1]} : vector<4x16xf32> to vector<1x16xf32>
    %21 = vector.broadcast %19 : vector<4x1xf32> to vector<4x16xf32>
    %22 = vector.broadcast %20 : vector<1x16xf32> to vector<4x16xf32>
    %23 = arith.mulf %21, %22 : vector<4x16xf32>
    %24 = arith.addf %6, %23 : vector<4x16xf32>
    %c0_8 = arith.constant 0 : index
    %c1 = arith.constant 1 : index
    %25 = vector.load %arg2[%c0_8, %c1] : memref<4x12xf32, #tpu.memory_space<vmem>>, vector<4x1xf32>
    %26 = vector.extract_strided_slice %18 {offsets = [1, 0], sizes = [1, 16], strides = [1, 1]} : vector<4x16xf32> to vector<1x16xf32>
    %27 = vector.broadcast %25 : vector<4x1xf32> to vector<4x16xf32>
    %28 = vector.broadcast %26 : vector<1x16xf32> to vector<4x16xf32>
    %29 = arith.mulf %27, %28 : vector<4x16xf32>
    %30 = arith.addf %24, %29 : vector<4x16xf32>
    %c0_9 = arith.constant 0 : index
    %c2 = arith.constant 2 : index
    %31 = vector.load %arg2[%c0_9, %c2] : memref<4x12xf32, #tpu.memory_space<vmem>>, vector<4x1xf32>
    %32 = vector.extract_strided_slice %18 {offsets = [2, 0], sizes = [1, 16], strides = [1, 1]} : vector<4x16xf32> to vector<1x16xf32>
    %33 = vector.broadcast %31 : vector<4x1xf32> to vector<4x16xf32>
    %34 = vector.broadcast %32 : vector<1x16xf32> to vector<4x16xf32>
    %35 = arith.mulf %33, %34 : vector<4x16xf32>
    %36 = arith.addf %30, %35 : vector<4x16xf32>
    %c0_10 = arith.constant 0 : index
    %c3 = arith.constant 3 : index
    %37 = vector.load %arg2[%c0_10, %c3] : memref<4x12xf32, #tpu.memory_space<vmem>>, vector<4x1xf32>
    %38 = vector.extract_strided_slice %18 {offsets = [3, 0], sizes = [1, 16], strides = [1, 1]} : vector<4x16xf32> to vector<1x16xf32>
    %39 = vector.broadcast %37 : vector<4x1xf32> to vector<4x16xf32>
    %40 = vector.broadcast %38 : vector<1x16xf32> to vector<4x16xf32>
    %41 = arith.mulf %39, %40 : vector<4x16xf32>
    %42 = arith.addf %36, %41 : vector<4x16xf32>
    %c0_11 = arith.constant 0 : index
    %c4 = arith.constant 4 : index
    %43 = vector.load %arg2[%c0_11, %c4] : memref<4x12xf32, #tpu.memory_space<vmem>>, vector<4x1xf32>
    %44 = vector.extract_strided_slice %4 {offsets = [0, 0], sizes = [1, 16], strides = [1, 1]} : vector<4x16xf32> to vector<1x16xf32>
    %45 = vector.broadcast %43 : vector<4x1xf32> to vector<4x16xf32>
    %46 = vector.broadcast %44 : vector<1x16xf32> to vector<4x16xf32>
    %47 = arith.mulf %45, %46 : vector<4x16xf32>
    %48 = arith.addf %42, %47 : vector<4x16xf32>
    %c0_12 = arith.constant 0 : index
    %c5 = arith.constant 5 : index
    %49 = vector.load %arg2[%c0_12, %c5] : memref<4x12xf32, #tpu.memory_space<vmem>>, vector<4x1xf32>
    %50 = vector.extract_strided_slice %4 {offsets = [1, 0], sizes = [1, 16], strides = [1, 1]} : vector<4x16xf32> to vector<1x16xf32>
    %51 = vector.broadcast %49 : vector<4x1xf32> to vector<4x16xf32>
    %52 = vector.broadcast %50 : vector<1x16xf32> to vector<4x16xf32>
    %53 = arith.mulf %51, %52 : vector<4x16xf32>
    %54 = arith.addf %48, %53 : vector<4x16xf32>
    %c0_13 = arith.constant 0 : index
    %c6 = arith.constant 6 : index
    %55 = vector.load %arg2[%c0_13, %c6] : memref<4x12xf32, #tpu.memory_space<vmem>>, vector<4x1xf32>
    %56 = vector.extract_strided_slice %4 {offsets = [2, 0], sizes = [1, 16], strides = [1, 1]} : vector<4x16xf32> to vector<1x16xf32>
    %57 = vector.broadcast %55 : vector<4x1xf32> to vector<4x16xf32>
    %58 = vector.broadcast %56 : vector<1x16xf32> to vector<4x16xf32>
    %59 = arith.mulf %57, %58 : vector<4x16xf32>
    %60 = arith.addf %54, %59 : vector<4x16xf32>
    %c0_14 = arith.constant 0 : index
    %c7 = arith.constant 7 : index
    %61 = vector.load %arg2[%c0_14, %c7] : memref<4x12xf32, #tpu.memory_space<vmem>>, vector<4x1xf32>
    %62 = vector.extract_strided_slice %4 {offsets = [3, 0], sizes = [1, 16], strides = [1, 1]} : vector<4x16xf32> to vector<1x16xf32>
    %63 = vector.broadcast %61 : vector<4x1xf32> to vector<4x16xf32>
    %64 = vector.broadcast %62 : vector<1x16xf32> to vector<4x16xf32>
    %65 = arith.mulf %63, %64 : vector<4x16xf32>
    %66 = arith.addf %60, %65 : vector<4x16xf32>
    %c15_i32 = arith.constant 15 : i32
    %67 = tpu.dynamic_rotate %4 by %c15_i32 dim 1 : vector<4x16xf32>, i32 -> vector<4x16xf32>
    %c1_i32_15 = arith.constant 1 : i32
    %68 = vector.broadcast %c1_i32_15 : i32 to vector<4x16xi32>
    %69 = arith.addi %5, %68 : vector<4x16xi32>
    %c0_i32_16 = arith.constant 0 : i32
    %70 = vector.broadcast %c0_i32_16 : i32 to vector<4x16xi32>
    %71 = arith.cmpi sge, %69, %70 : vector<4x16xi32>
    %c1_i32_17 = arith.constant 1 : i32
    %72 = vector.broadcast %c1_i32_17 : i32 to vector<4x16xi32>
    %73 = arith.addi %5, %72 : vector<4x16xi32>
    %c16_i32_18 = arith.constant 16 : i32
    %74 = vector.broadcast %c16_i32_18 : i32 to vector<4x16xi32>
    %75 = arith.cmpi slt, %73, %74 : vector<4x16xi32>
    %76 = arith.andi %71, %75 : vector<4x16xi1>
    %cst_19 = arith.constant 0.000000e+00 : f32
    %77 = vector.broadcast %cst_19 : f32 to vector<4x16xf32>
    %78 = arith.select %76, %67, %77 : vector<4x16xi1>, vector<4x16xf32>
    %c0_20 = arith.constant 0 : index
    %c8 = arith.constant 8 : index
    %79 = vector.load %arg2[%c0_20, %c8] : memref<4x12xf32, #tpu.memory_space<vmem>>, vector<4x1xf32>
    %80 = vector.extract_strided_slice %78 {offsets = [0, 0], sizes = [1, 16], strides = [1, 1]} : vector<4x16xf32> to vector<1x16xf32>
    %81 = vector.broadcast %79 : vector<4x1xf32> to vector<4x16xf32>
    %82 = vector.broadcast %80 : vector<1x16xf32> to vector<4x16xf32>
    %83 = arith.mulf %81, %82 : vector<4x16xf32>
    %84 = arith.addf %66, %83 : vector<4x16xf32>
    %c0_21 = arith.constant 0 : index
    %c9 = arith.constant 9 : index
    %85 = vector.load %arg2[%c0_21, %c9] : memref<4x12xf32, #tpu.memory_space<vmem>>, vector<4x1xf32>
    %86 = vector.extract_strided_slice %78 {offsets = [1, 0], sizes = [1, 16], strides = [1, 1]} : vector<4x16xf32> to vector<1x16xf32>
    %87 = vector.broadcast %85 : vector<4x1xf32> to vector<4x16xf32>
    %88 = vector.broadcast %86 : vector<1x16xf32> to vector<4x16xf32>
    %89 = arith.mulf %87, %88 : vector<4x16xf32>
    %90 = arith.addf %84, %89 : vector<4x16xf32>
    %c0_22 = arith.constant 0 : index
    %c10 = arith.constant 10 : index
    %91 = vector.load %arg2[%c0_22, %c10] : memref<4x12xf32, #tpu.memory_space<vmem>>, vector<4x1xf32>
    %92 = vector.extract_strided_slice %78 {offsets = [2, 0], sizes = [1, 16], strides = [1, 1]} : vector<4x16xf32> to vector<1x16xf32>
    %93 = vector.broadcast %91 : vector<4x1xf32> to vector<4x16xf32>
    %94 = vector.broadcast %92 : vector<1x16xf32> to vector<4x16xf32>
    %95 = arith.mulf %93, %94 : vector<4x16xf32>
    %96 = arith.addf %90, %95 : vector<4x16xf32>
    %c0_23 = arith.constant 0 : index
    %c11 = arith.constant 11 : index
    %97 = vector.load %arg2[%c0_23, %c11] : memref<4x12xf32, #tpu.memory_space<vmem>>, vector<4x1xf32>
    %98 = vector.extract_strided_slice %78 {offsets = [3, 0], sizes = [1, 16], strides = [1, 1]} : vector<4x16xf32> to vector<1x16xf32>
    %99 = vector.broadcast %97 : vector<4x1xf32> to vector<4x16xf32>
    %100 = vector.broadcast %98 : vector<1x16xf32> to vector<4x16xf32>
    %101 = arith.mulf %99, %100 : vector<4x16xf32>
    %102 = arith.addf %96, %101 : vector<4x16xf32>
    %c0_24 = arith.constant 0 : index
    %c0_25 = arith.constant 0 : index
    %103 = vector.load %arg3[%c0_24, %c0_25] : memref<4x1xf32, #tpu.memory_space<vmem>>, vector<4x1xf32>
    %104 = vector.broadcast %103 : vector<4x1xf32> to vector<4x16xf32>
    %105 = arith.addf %102, %104 : vector<4x16xf32>
    %cst_26 = arith.constant 0.000000e+00 : f32
    %106 = vector.broadcast %cst_26 : f32 to vector<4x16xf32>
    %107 = arith.cmpf ogt, %105, %106 : vector<4x16xf32>
    %cst_27 = arith.constant 2.000000e-01 : f32
    %108 = vector.broadcast %cst_27 : f32 to vector<4x16xf32>
    %109 = arith.mulf %108, %105 : vector<4x16xf32>
    %110 = arith.select %107, %105, %109 : vector<4x16xi1>, vector<4x16xf32>
    %c0_28 = arith.constant 0 : index
    %c0_29 = arith.constant 0 : index
    %111 = vector.load %arg4[%c0_28, %c0_29] : memref<4x1xf32, #tpu.memory_space<vmem>>, vector<4x1xf32>
    %cst_30 = arith.constant dense<0.000000e+00> : vector<4xf32>
    %112 = vector.multi_reduction <add>, %110, %cst_30 [1] : vector<4x16xf32> to vector<4xf32>
    %113 = vector.shape_cast %112 : vector<4xf32> to vector<4x1xf32>
    %114 = arith.addf %111, %113 : vector<4x1xf32>
    %c0_31 = arith.constant 0 : index
    %c0_32 = arith.constant 0 : index
    %115 = vector.load %arg4[%c0_31, %c0_32] : memref<4x1xf32, #tpu.memory_space<vmem>>, vector<4x1xf32>
    tpu.vector_store %arg4[%c0_31, %c0_32], %114 {strides = array<i32>} : memref<4x1xf32, #tpu.memory_space<vmem>>, vector<4x1xf32>,
    %c0_33 = arith.constant 0 : index
    %c0_34 = arith.constant 0 : index
    %116 = vector.load %arg5[%c0_33, %c0_34] : memref<4x1xf32, #tpu.memory_space<vmem>>, vector<4x1xf32>
    %117 = arith.mulf %110, %110 : vector<4x16xf32>
    %cst_35 = arith.constant dense<0.000000e+00> : vector<4xf32>
    %118 = vector.multi_reduction <add>, %117, %cst_35 [1] : vector<4x16xf32> to vector<4xf32>
    %119 = vector.shape_cast %118 : vector<4xf32> to vector<4x1xf32>
    %120 = arith.addf %116, %119 : vector<4x1xf32>
    %c0_36 = arith.constant 0 : index
    %c0_37 = arith.constant 0 : index
    %121 = vector.load %arg5[%c0_36, %c0_37] : memref<4x1xf32, #tpu.memory_space<vmem>>, vector<4x1xf32>
    tpu.vector_store %arg5[%c0_36, %c0_37], %120 {strides = array<i32>} : memref<4x1xf32, #tpu.memory_space<vmem>>, vector<4x1xf32>,
    return
  }
  func.func @transform_0(%arg0: i32) -> (i32, i32, i32) {
    %c0_i32 = arith.constant 0 : i32
    %c0_i32_0 = arith.constant 0 : i32
    %c0_i32_1 = arith.constant 0 : i32
    return %arg0, %c0_i32, %c0_i32_0 : i32, i32, i32
  }
  func.func @transform_1(%arg0: i32) -> (i32, i32) {
    %c0_i32 = arith.constant 0 : i32
    %c0_i32_0 = arith.constant 0 : i32
    %c0_i32_1 = arith.constant 0 : i32
    return %c0_i32, %c0_i32_0 : i32, i32
  }
  func.func @transform_2(%arg0: i32) -> (i32, i32) {
    %c0_i32 = arith.constant 0 : i32
    %c0_i32_0 = arith.constant 0 : i32
    %c0_i32_1 = arith.constant 0 : i32
    return %c0_i32, %c0_i32_0 : i32, i32
  }
  func.func @transform_3(%arg0: i32) -> (i32, i32) {
    %c0_i32 = arith.constant 0 : i32
    %c0_i32_0 = arith.constant 0 : i32
    %c0_i32_1 = arith.constant 0 : i32
    return %c0_i32, %c0_i32_0 : i32, i32
  }
  func.func @transform_4(%arg0: i32) -> (i32, i32) {
    %c0_i32 = arith.constant 0 : i32
    %c0_i32_0 = arith.constant 0 : i32
    %c0_i32_1 = arith.constant 0 : i32
    return %c0_i32, %c0_i32_0 : i32, i32
  }
}

module attributes {stable_mosaic.version = 11 : i64} {
  func.func @_norm_kernel(%arg0: i32, %arg1: memref<1x4x16xf32, #tpu.memory_space<vmem>>, %arg2: memref<4x12xf32, #tpu.memory_space<vmem>>, %arg3: memref<4x1xf32, #tpu.memory_space<vmem>>, %arg4: memref<4x1xf32, #tpu.memory_space<vmem>>, %arg5: memref<4x1xf32, #tpu.memory_space<vmem>>, %arg6: memref<1x4x16xf32, #tpu.memory_space<vmem>>) attributes {dimension_semantics = [#tpu.dimension_semantics<parallel>], iteration_bounds = array<i64: 2>, scalar_prefetch = 0 : i64, scratch_operands = 0 : i64, tpu.core_type = #tpu.core_type<tc>, window_params = [{transform_indices = @transform_0, window_bounds = array<i64: 1, 4, 16>}, {pipeline_mode = #tpu.pipeline_mode<synchronous>, transform_indices = @transform_1, window_bounds = array<i64: 4, 12>}, {pipeline_mode = #tpu.pipeline_mode<synchronous>, transform_indices = @transform_2, window_bounds = array<i64: 4, 1>}, {pipeline_mode = #tpu.pipeline_mode<synchronous>, transform_indices = @transform_3, window_bounds = array<i64: 4, 1>}, {pipeline_mode = #tpu.pipeline_mode<synchronous>, transform_indices = @transform_4, window_bounds = array<i64: 4, 1>}, {transform_indices = @transform_5, window_bounds = array<i64: 1, 4, 16>}]} {
    %c0 = arith.constant 0 : index
    %c0_0 = arith.constant 0 : index
    %c0_1 = arith.constant 0 : index
    %0 = vector.load %arg1[%c0, %c0_0, %c0_1] : memref<1x4x16xf32, #tpu.memory_space<vmem>>, vector<1x4x16xf32>
    %1 = vector.shape_cast %0 : vector<1x4x16xf32> to vector<4x16xf32>
    %2 = tpu.iota {dimensions = array<i32: 1>} : vector<4x16xi32>
    %cst = arith.constant 0.000000e+00 : f32
    %3 = vector.broadcast %cst : f32 to vector<4x16xf32>
    %c1_i32 = arith.constant 1 : i32
    %4 = tpu.dynamic_rotate %1 by %c1_i32 dim 1 : vector<4x16xf32>, i32 -> vector<4x16xf32>
    %c-1_i32 = arith.constant -1 : i32
    %5 = vector.broadcast %c-1_i32 : i32 to vector<4x16xi32>
    %6 = arith.addi %2, %5 : vector<4x16xi32>
    %c0_i32 = arith.constant 0 : i32
    %7 = vector.broadcast %c0_i32 : i32 to vector<4x16xi32>
    %8 = arith.cmpi sge, %6, %7 : vector<4x16xi32>
    %c-1_i32_2 = arith.constant -1 : i32
    %9 = vector.broadcast %c-1_i32_2 : i32 to vector<4x16xi32>
    %10 = arith.addi %2, %9 : vector<4x16xi32>
    %c16_i32 = arith.constant 16 : i32
    %11 = vector.broadcast %c16_i32 : i32 to vector<4x16xi32>
    %12 = arith.cmpi slt, %10, %11 : vector<4x16xi32>
    %13 = arith.andi %8, %12 : vector<4x16xi1>
    %cst_3 = arith.constant 0.000000e+00 : f32
    %14 = vector.broadcast %cst_3 : f32 to vector<4x16xf32>
    %15 = arith.select %13, %4, %14 : vector<4x16xi1>, vector<4x16xf32>
    %c0_4 = arith.constant 0 : index
    %c0_5 = arith.constant 0 : index
    %16 = vector.load %arg2[%c0_4, %c0_5] : memref<4x12xf32, #tpu.memory_space<vmem>>, vector<4x1xf32>
    %17 = vector.extract_strided_slice %15 {offsets = [0, 0], sizes = [1, 16], strides = [1, 1]} : vector<4x16xf32> to vector<1x16xf32>
    %18 = vector.broadcast %16 : vector<4x1xf32> to vector<4x16xf32>
    %19 = vector.broadcast %17 : vector<1x16xf32> to vector<4x16xf32>
    %20 = arith.mulf %18, %19 : vector<4x16xf32>
    %21 = arith.addf %3, %20 : vector<4x16xf32>
    %c0_6 = arith.constant 0 : index
    %c1 = arith.constant 1 : index
    %22 = vector.load %arg2[%c0_6, %c1] : memref<4x12xf32, #tpu.memory_space<vmem>>, vector<4x1xf32>
    %23 = vector.extract_strided_slice %15 {offsets = [1, 0], sizes = [1, 16], strides = [1, 1]} : vector<4x16xf32> to vector<1x16xf32>
    %24 = vector.broadcast %22 : vector<4x1xf32> to vector<4x16xf32>
    %25 = vector.broadcast %23 : vector<1x16xf32> to vector<4x16xf32>
    %26 = arith.mulf %24, %25 : vector<4x16xf32>
    %27 = arith.addf %21, %26 : vector<4x16xf32>
    %c0_7 = arith.constant 0 : index
    %c2 = arith.constant 2 : index
    %28 = vector.load %arg2[%c0_7, %c2] : memref<4x12xf32, #tpu.memory_space<vmem>>, vector<4x1xf32>
    %29 = vector.extract_strided_slice %15 {offsets = [2, 0], sizes = [1, 16], strides = [1, 1]} : vector<4x16xf32> to vector<1x16xf32>
    %30 = vector.broadcast %28 : vector<4x1xf32> to vector<4x16xf32>
    %31 = vector.broadcast %29 : vector<1x16xf32> to vector<4x16xf32>
    %32 = arith.mulf %30, %31 : vector<4x16xf32>
    %33 = arith.addf %27, %32 : vector<4x16xf32>
    %c0_8 = arith.constant 0 : index
    %c3 = arith.constant 3 : index
    %34 = vector.load %arg2[%c0_8, %c3] : memref<4x12xf32, #tpu.memory_space<vmem>>, vector<4x1xf32>
    %35 = vector.extract_strided_slice %15 {offsets = [3, 0], sizes = [1, 16], strides = [1, 1]} : vector<4x16xf32> to vector<1x16xf32>
    %36 = vector.broadcast %34 : vector<4x1xf32> to vector<4x16xf32>
    %37 = vector.broadcast %35 : vector<1x16xf32> to vector<4x16xf32>
    %38 = arith.mulf %36, %37 : vector<4x16xf32>
    %39 = arith.addf %33, %38 : vector<4x16xf32>
    %c0_9 = arith.constant 0 : index
    %c4 = arith.constant 4 : index
    %40 = vector.load %arg2[%c0_9, %c4] : memref<4x12xf32, #tpu.memory_space<vmem>>, vector<4x1xf32>
    %41 = vector.extract_strided_slice %1 {offsets = [0, 0], sizes = [1, 16], strides = [1, 1]} : vector<4x16xf32> to vector<1x16xf32>
    %42 = vector.broadcast %40 : vector<4x1xf32> to vector<4x16xf32>
    %43 = vector.broadcast %41 : vector<1x16xf32> to vector<4x16xf32>
    %44 = arith.mulf %42, %43 : vector<4x16xf32>
    %45 = arith.addf %39, %44 : vector<4x16xf32>
    %c0_10 = arith.constant 0 : index
    %c5 = arith.constant 5 : index
    %46 = vector.load %arg2[%c0_10, %c5] : memref<4x12xf32, #tpu.memory_space<vmem>>, vector<4x1xf32>
    %47 = vector.extract_strided_slice %1 {offsets = [1, 0], sizes = [1, 16], strides = [1, 1]} : vector<4x16xf32> to vector<1x16xf32>
    %48 = vector.broadcast %46 : vector<4x1xf32> to vector<4x16xf32>
    %49 = vector.broadcast %47 : vector<1x16xf32> to vector<4x16xf32>
    %50 = arith.mulf %48, %49 : vector<4x16xf32>
    %51 = arith.addf %45, %50 : vector<4x16xf32>
    %c0_11 = arith.constant 0 : index
    %c6 = arith.constant 6 : index
    %52 = vector.load %arg2[%c0_11, %c6] : memref<4x12xf32, #tpu.memory_space<vmem>>, vector<4x1xf32>
    %53 = vector.extract_strided_slice %1 {offsets = [2, 0], sizes = [1, 16], strides = [1, 1]} : vector<4x16xf32> to vector<1x16xf32>
    %54 = vector.broadcast %52 : vector<4x1xf32> to vector<4x16xf32>
    %55 = vector.broadcast %53 : vector<1x16xf32> to vector<4x16xf32>
    %56 = arith.mulf %54, %55 : vector<4x16xf32>
    %57 = arith.addf %51, %56 : vector<4x16xf32>
    %c0_12 = arith.constant 0 : index
    %c7 = arith.constant 7 : index
    %58 = vector.load %arg2[%c0_12, %c7] : memref<4x12xf32, #tpu.memory_space<vmem>>, vector<4x1xf32>
    %59 = vector.extract_strided_slice %1 {offsets = [3, 0], sizes = [1, 16], strides = [1, 1]} : vector<4x16xf32> to vector<1x16xf32>
    %60 = vector.broadcast %58 : vector<4x1xf32> to vector<4x16xf32>
    %61 = vector.broadcast %59 : vector<1x16xf32> to vector<4x16xf32>
    %62 = arith.mulf %60, %61 : vector<4x16xf32>
    %63 = arith.addf %57, %62 : vector<4x16xf32>
    %c15_i32 = arith.constant 15 : i32
    %64 = tpu.dynamic_rotate %1 by %c15_i32 dim 1 : vector<4x16xf32>, i32 -> vector<4x16xf32>
    %c1_i32_13 = arith.constant 1 : i32
    %65 = vector.broadcast %c1_i32_13 : i32 to vector<4x16xi32>
    %66 = arith.addi %2, %65 : vector<4x16xi32>
    %c0_i32_14 = arith.constant 0 : i32
    %67 = vector.broadcast %c0_i32_14 : i32 to vector<4x16xi32>
    %68 = arith.cmpi sge, %66, %67 : vector<4x16xi32>
    %c1_i32_15 = arith.constant 1 : i32
    %69 = vector.broadcast %c1_i32_15 : i32 to vector<4x16xi32>
    %70 = arith.addi %2, %69 : vector<4x16xi32>
    %c16_i32_16 = arith.constant 16 : i32
    %71 = vector.broadcast %c16_i32_16 : i32 to vector<4x16xi32>
    %72 = arith.cmpi slt, %70, %71 : vector<4x16xi32>
    %73 = arith.andi %68, %72 : vector<4x16xi1>
    %cst_17 = arith.constant 0.000000e+00 : f32
    %74 = vector.broadcast %cst_17 : f32 to vector<4x16xf32>
    %75 = arith.select %73, %64, %74 : vector<4x16xi1>, vector<4x16xf32>
    %c0_18 = arith.constant 0 : index
    %c8 = arith.constant 8 : index
    %76 = vector.load %arg2[%c0_18, %c8] : memref<4x12xf32, #tpu.memory_space<vmem>>, vector<4x1xf32>
    %77 = vector.extract_strided_slice %75 {offsets = [0, 0], sizes = [1, 16], strides = [1, 1]} : vector<4x16xf32> to vector<1x16xf32>
    %78 = vector.broadcast %76 : vector<4x1xf32> to vector<4x16xf32>
    %79 = vector.broadcast %77 : vector<1x16xf32> to vector<4x16xf32>
    %80 = arith.mulf %78, %79 : vector<4x16xf32>
    %81 = arith.addf %63, %80 : vector<4x16xf32>
    %c0_19 = arith.constant 0 : index
    %c9 = arith.constant 9 : index
    %82 = vector.load %arg2[%c0_19, %c9] : memref<4x12xf32, #tpu.memory_space<vmem>>, vector<4x1xf32>
    %83 = vector.extract_strided_slice %75 {offsets = [1, 0], sizes = [1, 16], strides = [1, 1]} : vector<4x16xf32> to vector<1x16xf32>
    %84 = vector.broadcast %82 : vector<4x1xf32> to vector<4x16xf32>
    %85 = vector.broadcast %83 : vector<1x16xf32> to vector<4x16xf32>
    %86 = arith.mulf %84, %85 : vector<4x16xf32>
    %87 = arith.addf %81, %86 : vector<4x16xf32>
    %c0_20 = arith.constant 0 : index
    %c10 = arith.constant 10 : index
    %88 = vector.load %arg2[%c0_20, %c10] : memref<4x12xf32, #tpu.memory_space<vmem>>, vector<4x1xf32>
    %89 = vector.extract_strided_slice %75 {offsets = [2, 0], sizes = [1, 16], strides = [1, 1]} : vector<4x16xf32> to vector<1x16xf32>
    %90 = vector.broadcast %88 : vector<4x1xf32> to vector<4x16xf32>
    %91 = vector.broadcast %89 : vector<1x16xf32> to vector<4x16xf32>
    %92 = arith.mulf %90, %91 : vector<4x16xf32>
    %93 = arith.addf %87, %92 : vector<4x16xf32>
    %c0_21 = arith.constant 0 : index
    %c11 = arith.constant 11 : index
    %94 = vector.load %arg2[%c0_21, %c11] : memref<4x12xf32, #tpu.memory_space<vmem>>, vector<4x1xf32>
    %95 = vector.extract_strided_slice %75 {offsets = [3, 0], sizes = [1, 16], strides = [1, 1]} : vector<4x16xf32> to vector<1x16xf32>
    %96 = vector.broadcast %94 : vector<4x1xf32> to vector<4x16xf32>
    %97 = vector.broadcast %95 : vector<1x16xf32> to vector<4x16xf32>
    %98 = arith.mulf %96, %97 : vector<4x16xf32>
    %99 = arith.addf %93, %98 : vector<4x16xf32>
    %c0_22 = arith.constant 0 : index
    %c0_23 = arith.constant 0 : index
    %100 = vector.load %arg3[%c0_22, %c0_23] : memref<4x1xf32, #tpu.memory_space<vmem>>, vector<4x1xf32>
    %101 = vector.broadcast %100 : vector<4x1xf32> to vector<4x16xf32>
    %102 = arith.addf %99, %101 : vector<4x16xf32>
    %cst_24 = arith.constant 0.000000e+00 : f32
    %103 = vector.broadcast %cst_24 : f32 to vector<4x16xf32>
    %104 = arith.cmpf ogt, %102, %103 : vector<4x16xf32>
    %cst_25 = arith.constant 2.000000e-01 : f32
    %105 = vector.broadcast %cst_25 : f32 to vector<4x16xf32>
    %106 = arith.mulf %105, %102 : vector<4x16xf32>
    %107 = arith.select %104, %102, %106 : vector<4x16xi1>, vector<4x16xf32>
    %c0_26 = arith.constant 0 : index
    %c0_27 = arith.constant 0 : index
    %108 = vector.load %arg4[%c0_26, %c0_27] : memref<4x1xf32, #tpu.memory_space<vmem>>, vector<4x1xf32>
    %109 = vector.broadcast %108 : vector<4x1xf32> to vector<4x16xf32>
    %110 = arith.mulf %107, %109 : vector<4x16xf32>
    %111 = arith.addf %1, %110 : vector<4x16xf32>
    %c0_28 = arith.constant 0 : index
    %c0_29 = arith.constant 0 : index
    %112 = vector.load %arg5[%c0_28, %c0_29] : memref<4x1xf32, #tpu.memory_space<vmem>>, vector<4x1xf32>
    %113 = vector.broadcast %112 : vector<4x1xf32> to vector<4x16xf32>
    %114 = arith.addf %111, %113 : vector<4x16xf32>
    %c0_30 = arith.constant 0 : index
    %c0_31 = arith.constant 0 : index
    %c0_32 = arith.constant 0 : index
    %115 = vector.load %arg6[%c0_30, %c0_31, %c0_32] : memref<1x4x16xf32, #tpu.memory_space<vmem>>, vector<1x4x16xf32>
    %116 = vector.shape_cast %115 : vector<1x4x16xf32> to vector<4x16xf32>
    %117 = vector.shape_cast %114 : vector<4x16xf32> to vector<1x4x16xf32>
    tpu.vector_store %arg6[%c0_30, %c0_31, %c0_32], %117 {strides = array<i32>} : memref<1x4x16xf32, #tpu.memory_space<vmem>>, vector<1x4x16xf32>,
    return
  }
  func.func @transform_0(%arg0: i32) -> (i32, i32, i32) {
    %c0_i32 = arith.constant 0 : i32
    %c0_i32_0 = arith.constant 0 : i32
    %c0_i32_1 = arith.constant 0 : i32
    return %arg0, %c0_i32, %c0_i32_0 : i32, i32, i32
  }
  func.func @transform_1(%arg0: i32) -> (i32, i32) {
    %c0_i32 = arith.constant 0 : i32
    %c0_i32_0 = arith.constant 0 : i32
    %c0_i32_1 = arith.constant 0 : i32
    return %c0_i32, %c0_i32_0 : i32, i32
  }
  func.func @transform_2(%arg0: i32) -> (i32, i32) {
    %c0_i32 = arith.constant 0 : i32
    %c0_i32_0 = arith.constant 0 : i32
    %c0_i32_1 = arith.constant 0 : i32
    return %c0_i32, %c0_i32_0 : i32, i32
  }
  func.func @transform_3(%arg0: i32) -> (i32, i32) {
    %c0_i32 = arith.constant 0 : i32
    %c0_i32_0 = arith.constant 0 : i32
    %c0_i32_1 = arith.constant 0 : i32
    return %c0_i32, %c0_i32_0 : i32, i32
  }
  func.func @transform_4(%arg0: i32) -> (i32, i32) {
    %c0_i32 = arith.constant 0 : i32
    %c0_i32_0 = arith.constant 0 : i32
    %c0_i32_1 = arith.constant 0 : i32
    return %c0_i32, %c0_i32_0 : i32, i32
  }
  func.func @transform_5(%arg0: i32) -> (i32, i32, i32) {
    %c0_i32 = arith.constant 0 : i32
    %c0_i32_0 = arith.constant 0 : i32
    %c0_i32_1 = arith.constant 0 : i32
    return %arg0, %c0_i32, %c0_i32_0 : i32, i32, i32
  }
}

</mosaic_0001>

<llo_original>
// kernel: discriminator_block.2
$region0: #{discriminator_block.2}
  #allocation0 [shape = 'u32[]', space=smem, size = 0x4, offset = 0x4, fixed_abs, tag = 'smem constant byte address 0x4 - core index']
  #allocation1 [shape = 'u32[144,128]{1,0:T(1,128)}', space=vmem, size = 0x12000, scoped, tag = 'internal scratch']
  %s0 = inlined_call_operand.vmem [shape: f32[2,4,16], index: 0, kind: input, shape index: {}]
  %s1 = inlined_call_operand.vmem [shape: f32[4,12], index: 1, kind: input, shape index: {}]
  %s2 = inlined_call_operand.vmem [shape: f32[4,1], index: 2, kind: input, shape index: {}]
  %s3 = inlined_call_operand.vmem [shape: f32[4,1], index: 3, kind: output, shape index: {0}]
  %s4 = inlined_call_operand.vmem [shape: f32[4,1], index: 4, kind: output, shape index: {1}]
  %5 = xla_tuple %s3, %s4
  %s6 = sld [smem:[#allocation0]]
  $region57: #{discriminator_block.2} parent=0
    _
  %s8 = ssub.s32 1, %s6
  %s9 = scalar_select 0, %s8, %s6
  loop: start=0, step=1, limit=4
  $region2: #{discriminator_block.2} parent=0 // loop_pre_header
    _
  $region3: #{discriminator_block.2} parent=0 // loop_header
    %s11 = sphi 0, %s15
    %p12 = scmp.ge.s32.totalorder %s11, 4
    %s21 = sphi 0, %s23
    %s24 = sphi 0, %s21
    %s25 = sphi 0, %s24
    %s41 = sphi 0, %s25
    %s45 = sphi 0, %s45
    %s47 = sphi 0, %s45
    %s48 = sphi 0, %s47
    %s62 = sphi 0, %s48
    %s66 = sphi 0, %s66
    %s68 = sphi 0, %s66
    %s69 = sphi 0, %s68
    %s83 = sphi 0, %s69
    %s87 = sphi 0, %s87
    %s89 = sphi 0, %s87
    %s90 = sphi 0, %s89
    %s104 = sphi 0, %s90
    %s108 = sphi 0, %s108
    %s110 = sphi 0, %s108
    %s111 = sphi 0, %s110
    %s125 = sphi 0, %s111
  $region4: #{discriminator_block.2} parent=0 // loop_header_branch
    %14 = sbr.rel (%p12) target = $region8
  $region5: #{discriminator_block.2} parent=0 // loop_body
    %s16 = ssub.s32 %s11, 1
    %s17 = ssub.s32 %s11, 2
    %s18 = sadd.s32 %s11, 1
    %s19 = ssub.s32 %s11, %s18
    %p20 = scmp.eq.s32.totalorder %s19, 0
    %s22 = sadd.s32 %s21, 1
    %s23 = scalar_select %p20, %s21, %s22
    %p26 = pneg %p20
    %p27 = scmp.eq.s32.totalorder %s11, 1
    %p28 = por %p26, %p27
    %p29 = scmp.ne.s32.totalorder %s21, %s24
    %p30 = scmp.eq.s32.totalorder %s11, 0
    %p31 = por %p29, %p30
    %p32 = scmp.ne.s32.totalorder %s21, %s24
    %p33 = scmp.eq.s32.totalorder %s16, 1
    %p34 = por %p32, %p33
    %p35 = scmp.ne.s32.totalorder %s24, %s25
    %p36 = scmp.eq.s32.totalorder %s16, 0
    %p37 = por %p35, %p36
    %p38 = scmp.ne.s32.totalorder %s24, %s25
    %p39 = scmp.eq.s32.totalorder %s17, 1
    %p40 = por %p38, %p39
    %p42 = scmp.ne.s32.totalorder %s25, %s41
    %p43 = scmp.eq.s32.totalorder %s17, 0
    %p44 = por %p42, %p43
    %s46 = sadd.s32 %s45, 1
    %p49 = scmp.eq.s32.totalorder %s11, 1
    %p50 = scmp.ne.s32.totalorder %s45, %s47
    %p51 = scmp.eq.s32.totalorder %s11, 0
    %p52 = por %p50, %p51
    %p53 = scmp.ne.s32.totalorder %s45, %s47
    %p54 = scmp.eq.s32.totalorder %s16, 1
    %p55 = por %p53, %p54
    %p56 = scmp.ne.s32.totalorder %s47, %s48
    %p57 = scmp.eq.s32.totalorder %s16, 0
    %p58 = por %p56, %p57
    %p59 = scmp.ne.s32.totalorder %s47, %s48
    %p60 = scmp.eq.s32.totalorder %s17, 1
    %p61 = por %p59, %p60
    %p63 = scmp.ne.s32.totalorder %s48, %s62
    %p64 = scmp.eq.s32.totalorder %s17, 0
    %p65 = por %p63, %p64
    %s67 = sadd.s32 %s66, 1
    %p70 = scmp.eq.s32.totalorder %s11, 1
    %p71 = scmp.ne.s32.totalorder %s66, %s68
    %p72 = scmp.eq.s32.totalorder %s11, 0
    %p73 = por %p71, %p72
    %p74 = scmp.ne.s32.totalorder %s66, %s68
    %p75 = scmp.eq.s32.totalorder %s16, 1
    %p76 = por %p74, %p75
    %p77 = scmp.ne.s32.totalorder %s68, %s69
    %p78 = scmp.eq.s32.totalorder %s16, 0
    %p79 = por %p77, %p78
    %p80 = scmp.ne.s32.totalorder %s68, %s69
    %p81 = scmp.eq.s32.totalorder %s17, 1
    %p82 = por %p80, %p81
    %p84 = scmp.ne.s32.totalorder %s69, %s83
    %p85 = scmp.eq.s32.totalorder %s17, 0
    %p86 = por %p84, %p85
    %s88 = sadd.s32 %s87, 1
    %p91 = scmp.eq.s32.totalorder %s11, 1
    %p92 = scmp.ne.s32.totalorder %s87, %s89
    %p93 = scmp.eq.s32.totalorder %s11, 0
    %p94 = por %p92, %p93
    %p95 = scmp.ne.s32.totalorder %s87, %s89
    %p96 = scmp.eq.s32.totalorder %s16, 1
    %p97 = por %p95, %p96
    %p98 = scmp.ne.s32.totalorder %s89, %s90
    %p99 = scmp.eq.s32.totalorder %s16, 0
    %p100 = por %p98, %p99
    %p101 = scmp.ne.s32.totalorder %s89, %s90
    %p102 = scmp.eq.s32.totalorder %s17, 1
    %p103 = por %p101, %p102
    %p105 = scmp.ne.s32.totalorder %s90, %s104
    %p106 = scmp.eq.s32.totalorder %s17, 0
    %p107 = por %p105, %p106
    %s109 = sadd.s32 %s108, 1
    %p112 = scmp.eq.s32.totalorder %s11, 1
    %p113 = scmp.ne.s32.totalorder %s108, %s110
    %p114 = scmp.eq.s32.totalorder %s11, 0
    %p115 = por %p113, %p114
    %p116 = scmp.ne.s32.totalorder %s108, %s110
    %p117 = scmp.eq.s32.totalorder %s16, 1
    %p118 = por %p116, %p117
    %p119 = scmp.ne.s32.totalorder %s110, %s111
    %p120 = scmp.eq.s32.totalorder %s16, 0
    %p121 = por %p119, %p120
    %p122 = scmp.ne.s32.totalorder %s110, %s111
    %p123 = scmp.eq.s32.totalorder %s17, 1
    %p124 = por %p122, %p123
    %p126 = scmp.ne.s32.totalorder %s111, %s125
    %p127 = scmp.eq.s32.totalorder %s17, 0
    %p128 = por %p126, %p127
    %p129 = scmp.le.s32.totalorder 1, %s11
    %p130 = scmp.lt.s32.totalorder %s11, 3
    %p131 = pnand %p129, %p130
    %p132 = pneg %p131
    // Predicated region
    $region9: #{discriminator_block.2} parent=5 // pred_check
      _
    $region10: #{discriminator_block.2} parent=5 // pred_check_branch
      %134 = sbr.rel (%p131) target = $region12
    $region11: #{discriminator_block.2} parent=5 // pred_region
      %s135 = ssub.s32 %s11, 1
      // Predicated region
      $region13: #{discriminator_block.2} parent=11 // pred_check
        %p136 = pneg %p58
      $region14: #{discriminator_block.2} parent=11 // pred_check_branch
        %138 = sbr.rel (%p136) target = $region16
      $region15: #{discriminator_block.2} parent=11 // pred_region
        _
      $region16: #{discriminator_block.2} parent=11 // pred_fallthru
        _
      // Predicated region
      $region17: #{discriminator_block.2} parent=11 // pred_check
        %p139 = pneg %p79
      $region18: #{discriminator_block.2} parent=11 // pred_check_branch
        %141 = sbr.rel (%p139) target = $region20
      $region19: #{discriminator_block.2} parent=11 // pred_region
        _
      $region20: #{discriminator_block.2} parent=11 // pred_fallthru
        _
    $region12: #{discriminator_block.2} parent=5 // pred_fallthru
      _
    %p142 = scmp.lt.s32.totalorder %s11, 2
    // Predicated region
    $region21: #{discriminator_block.2} parent=5 // pred_check
      %p143 = pneg %p142
    $region22: #{discriminator_block.2} parent=5 // pred_check_branch
      %145 = sbr.rel (%p143) target = $region24
    $region23: #{discriminator_block.2} parent=5 // pred_region
      // Predicated region
      $region25: #{discriminator_block.2} parent=23 // pred_check
        %p146 = pneg %p31
      $region26: #{discriminator_block.2} parent=23 // pred_check_branch
        %148 = sbr.rel (%p146) target = $region28
      $region27: #{discriminator_block.2} parent=23 // pred_region
        %p149 = scmp.lt.s32.totalorder %s11, 1
        %s150 = scalar_select %p149, %s11, 1
        %s151 = smul.addr %s150, 4
        %s152 = scalar_lea.vmem %s0, %s151
      $region28: #{discriminator_block.2} parent=23 // pred_fallthru
        _
    $region24: #{discriminator_block.2} parent=5 // pred_fallthru
      _
    %p153 = scmp.le.s32.totalorder 1, %s11
    %p154 = scmp.lt.s32.totalorder %s11, 3
    %p155 = pnand %p153, %p154
    %p156 = pneg %p155
    // Predicated region
    $region29: #{discriminator_block.2} parent=5 // pred_check
      _
    $region30: #{discriminator_block.2} parent=5 // pred_check_branch
      %158 = sbr.rel (%p155) target = $region32
    $region31: #{discriminator_block.2} parent=5 // pred_region
      %s159 = ssub.s32 %s11, 1
      %p160 = scmp.lt.s32.totalorder %s16, 1
      %s161 = scalar_select %p160, %s16, 1
      %s162 = smul.addr %s161, 4
      %s163 = scalar_lea.vmem %s0, %s162
      %p164 = pneg %p37
      %p165 = pneg %p34
      %p166 = pneg %p58
      %p167 = pneg %p55
      %p168 = pneg %p79
      %p169 = pneg %p76
      %p170 = pneg %p100
      %p171 = pneg %p97
      %p172 = pneg %p121
      %p173 = pneg %p118
      %p174 = scmp.lt.s32.totalorder %s16, 1
      %s175 = scalar_select %p174, %s16, 1
      %s176 = smul.addr %s175, 4
      %s177 = scalar_lea.vmem %s0, %s176
      %p178 = scmp.eq.s32.totalorder %s16, 0
      // Predicated region
      $region33: #{discriminator_block.2} parent=31 // pred_check
        %p179 = pneg %p178
      $region34: #{discriminator_block.2} parent=31 // pred_check_branch
        %181 = sbr.rel (%p179) target = $region36
      $region35: #{discriminator_block.2} parent=31 // pred_region
        %vm182 = vcmask 3072
        %183 = vst.msk [vmem:[%s3] sm:$0xf] %vm182, 0.0
        %184 = vst.msk [vmem:[%s4] sm:$0xf] %vm182, 0.0
      $region36: #{discriminator_block.2} parent=31 // pred_fallthru
        _
      %v185 = vld [vmem:[%s177] sm:$0xf]
      %v186 = vlaneseq
      %v187 = vand.u32 %v186, 127
      %vm188 = vcmask 1047680
      %189 = vrot.lane.b32.xlu0 %v185, 16
      %v190 = vpop.permute.xlu0 %189
      %v191 = vsel %vm188, %v190, %v185
      %192 = vrot.lane.b32.xlu0 %v191, 16
      %v193 = vpop.permute.xlu0 %192
      %v194 = vsel %vm188, %v193, %v185
      %v195 = vadd.s32 %v187, 4294967295
      %vm196 = vcmp.ge.s32.totalorder %v195, 0
      %vm197 = vcmp.lt.s32.totalorder %v195, 16
      %vm198 = vmand %vm196, %vm197
      %200 = vrot.lane.b32.xlu0 %v194, 113
      %v201 = vpop.permute.xlu0 %200
      %v203 = vsel %vm198, %v201, 0.0
      %v204 = vld [vmem:[%s1] sm:$0xf]
      %206 = vset.pattern.permute.xlu0 0
      %207 = vperm.xlu0 %206, %v204
      %v208 = vpop.permute.xlu0 %207
      %v210 = vlaneseq
      %v211 = vshrl.u32 %v210, 7
      %v212 = vsub.s32 0, %v211
      %v213 = vrot.slane %v203, %v212
      %v214 = vmul.f32 %v208, %v213
      %v215 = vadd.f32 %v214, 0.0
      %216 = vset.pattern.permute.xlu0 1
      %217 = vperm.xlu0 %216, %v204
      %v218 = vpop.permute.xlu0 %217
      %v220 = vlaneseq
      %v221 = vshrl.u32 %v220, 7
      %v222 = vsub.s32 1, %v221
      %v223 = vrot.slane %v203, %v222
      %v224 = vmul.f32 %v218, %v223
      %v225 = vadd.f32 %v215, %v224
      %226 = vset.pattern.permute.xlu0 2
      %227 = vperm.xlu0 %226, %v204
      %v228 = vpop.permute.xlu0 %227
      %v230 = vlaneseq
      %v231 = vshrl.u32 %v230, 7
      %v232 = vsub.s32 2, %v231
      %v233 = vrot.slane %v203, %v232
      %v234 = vmul.f32 %v228, %v233
      %v235 = vadd.f32 %v225, %v234
      %236 = vset.pattern.permute.xlu0 3
      %237 = vperm.xlu0 %236, %v204
      %v238 = vpop.permute.xlu0 %237
      %v240 = vlaneseq
      %v241 = vshrl.u32 %v240, 7
      %v242 = vsub.s32 3, %v241
      %v243 = vrot.slane %v203, %v242
      %v244 = vmul.f32 %v238, %v243
      %v245 = vadd.f32 %v235, %v244
      %246 = vset.pattern.permute.xlu0 4
      %247 = vperm.xlu0 %246, %v204
      %v248 = vpop.permute.xlu0 %247
      %v250 = vlaneseq
      %v251 = vshrl.u32 %v250, 7
      %v252 = vsub.s32 0, %v251
      %v253 = vrot.slane %v185, %v252
      %v254 = vmul.f32 %v248, %v253
      %v255 = vadd.f32 %v245, %v254
      %256 = vset.pattern.permute.xlu0 5
      %257 = vperm.xlu0 %256, %v204
      %v258 = vpop.permute.xlu0 %257
      %v260 = vlaneseq
      %v261 = vshrl.u32 %v260, 7
      %v262 = vsub.s32 1, %v261
      %v263 = vrot.slane %v185, %v262
      %v264 = vmul.f32 %v258, %v263
      %v265 = vadd.f32 %v255, %v264
      %266 = vset.pattern.permute.xlu0 6
      %267 = vperm.xlu0 %266, %v204
      %v268 = vpop.permute.xlu0 %267
      %v270 = vlaneseq
      %v271 = vshrl.u32 %v270, 7
      %v272 = vsub.s32 2, %v271
      %v273 = vrot.slane %v185, %v272
      %v274 = vmul.f32 %v268, %v273
      %v275 = vadd.f32 %v265, %v274
      %276 = vset.pattern.permute.xlu0 7
      %277 = vperm.xlu0 %276, %v204
      %v278 = vpop.permute.xlu0 %277
      %v280 = vlaneseq
      %v281 = vshrl.u32 %v280, 7
      %v282 = vsub.s32 3, %v281
      %v283 = vrot.slane %v185, %v282
      %v284 = vmul.f32 %v278, %v283
      %v285 = vadd.f32 %v275, %v284
      %v286 = vadd.s32 %v187, 1
      %vm287 = vcmp.ge.s32.totalorder %v286, 0
      %vm288 = vcmp.lt.s32.totalorder %v286, 16
      %vm289 = vmand %vm287, %vm288
      %290 = vrot.lane.b32.xlu0 %v194, 127
      %v291 = vpop.permute.xlu0 %290
      %v293 = vsel %vm289, %v291, 0.0
      %294 = vset.pattern.permute.xlu0 8
      %295 = vperm.xlu0 %294, %v204
      %v296 = vpop.permute.xlu0 %295
      %v298 = vlaneseq
      %v299 = vshrl.u32 %v298, 7
      %v300 = vsub.s32 0, %v299
      %v301 = vrot.slane %v293, %v300
      %v302 = vmul.f32 %v296, %v301
      %v303 = vadd.f32 %v285, %v302
      %304 = vset.pattern.permute.xlu0 9
      %305 = vperm.xlu0 %304, %v204
      %v306 = vpop.permute.xlu0 %305
      %v308 = vlaneseq
      %v309 = vshrl.u32 %v308, 7
      %v310 = vsub.s32 1, %v309
      %v311 = vrot.slane %v293, %v310
      %v312 = vmul.f32 %v306, %v311
      %v313 = vadd.f32 %v303, %v312
      %314 = vset.pattern.permute.xlu0 10
      %315 = vperm.xlu0 %314, %v204
      %v316 = vpop.permute.xlu0 %315
      %v318 = vlaneseq
      %v319 = vshrl.u32 %v318, 7
      %v320 = vsub.s32 2, %v319
      %v321 = vrot.slane %v293, %v320
      %v322 = vmul.f32 %v316, %v321
      %v323 = vadd.f32 %v313, %v322
      %324 = vset.pattern.permute.xlu0 11
      %325 = vperm.xlu0 %324, %v204
      %v326 = vpop.permute.xlu0 %325
      %v328 = vlaneseq
      %v329 = vshrl.u32 %v328, 7
      %v330 = vsub.s32 3, %v329
      %v331 = vrot.slane %v293, %v330
      %v332 = vmul.f32 %v326, %v331
      %v333 = vadd.f32 %v323, %v332
      %v334 = vld [vmem:[%s2] sm:$0xf]
      %336 = vset.pattern.permute.xlu0 0
      %337 = vperm.xlu0 %336, %v334
      %v338 = vpop.permute.xlu0 %337
      %v340 = vadd.f32 %v333, %v338
      %vm341 = vcmp.gt.f32.partialorder %v340, 0.0
      %v342 = vmul.f32 %v340, 0.2
      %v343 = vsel %vm341, %v340, %v342
      %v344 = vld [vmem:[%s3] sm:$0xf]
      %vm345 = vcmask 125952
      %v346 = vsel %vm345, %v343, 0.0
      %347 = vadd.xlane.f32.xlu0 %v346
      %v348 = vpop.xlane.xlu0 %347
      %v349 = vadd.f32 %v344, %v348
      %vm350 = vcmask 3072
      %351 = vst.msk [vmem:[%s3] sm:$0xf] %vm350, %v349
      %v352 = vld [vmem:[%s4] sm:$0xf]
      %v353 = vmul.f32 %v343, %v343
      %v354 = vsel %vm345, %v353, 0.0
      %355 = vadd.xlane.f32.xlu0 %v354
      %v356 = vpop.xlane.xlu0 %355
      %v357 = vadd.f32 %v352, %v356
      %358 = vst.msk [vmem:[%s4] sm:$0xf] %vm350, %v357
      // Predicated region
      $region37: #{discriminator_block.2} parent=31 // pred_check
        %p359 = pneg %p97
      $region38: #{discriminator_block.2} parent=31 // pred_check_branch
        %361 = sbr.rel (%p359) target = $region40
      $region39: #{discriminator_block.2} parent=31 // pred_region
        _
      $region40: #{discriminator_block.2} parent=31 // pred_fallthru
        _
      // Predicated region
      $region41: #{discriminator_block.2} parent=31 // pred_check
        %p362 = pneg %p118
      $region42: #{discriminator_block.2} parent=31 // pred_check_branch
        %364 = sbr.rel (%p362) target = $region44
      $region43: #{discriminator_block.2} parent=31 // pred_region
        _
      $region44: #{discriminator_block.2} parent=31 // pred_fallthru
        _
      // Predicated region
      $region45: #{discriminator_block.2} parent=31 // pred_check
        %p365 = pneg %p97
      $region46: #{discriminator_block.2} parent=31 // pred_check_branch
        %367 = sbr.rel (%p365) target = $region48
      $region47: #{discriminator_block.2} parent=31 // pred_region
        _
      $region48: #{discriminator_block.2} parent=31 // pred_fallthru
        _
      // Predicated region
      $region49: #{discriminator_block.2} parent=31 // pred_check
        %p368 = pneg %p118
      $region50: #{discriminator_block.2} parent=31 // pred_check_branch
        %370 = sbr.rel (%p368) target = $region52
      $region51: #{discriminator_block.2} parent=31 // pred_region
        _
      $region52: #{discriminator_block.2} parent=31 // pred_fallthru
        _
    $region32: #{discriminator_block.2} parent=5 // pred_fallthru
      _
    %p371 = scmp.le.s32.totalorder 2, %s11
    // Predicated region
    $region53: #{discriminator_block.2} parent=5 // pred_check
      %p372 = pneg %p371
    $region54: #{discriminator_block.2} parent=5 // pred_check_branch
      %374 = sbr.rel (%p372) target = $region56
    $region55: #{discriminator_block.2} parent=5 // pred_region
      %s375 = ssub.s32 %s11, 2
    $region56: #{discriminator_block.2} parent=5 // pred_fallthru
      _
  $region6: #{discriminator_block.2} parent=0 // loop_footer
    %s15 = sadd.s32 1, %s11
  $region7: #{discriminator_block.2} parent=0 // loop_footer_branch
    %10 = sbr.rel target = $region3
  $region8: #{discriminator_block.2} parent=0 // loop_exit
    _

// kernel: discriminator_block.3
$region0: #{discriminator_block.3}
  #allocation0 [shape = 'u32[]', space=smem, size = 0x4, offset = 0x4, fixed_abs, tag = 'smem constant byte address 0x4 - core index']
  #allocation1 [shape = 'u32[144,128]{1,0:T(1,128)}', space=vmem, size = 0x12000, scoped, tag = 'internal scratch']
  %s0 = inlined_call_operand.vmem [shape: f32[2,4,16], index: 0, kind: input, shape index: {}]
  %s1 = inlined_call_operand.vmem [shape: f32[4,12], index: 1, kind: input, shape index: {}]
  %s2 = inlined_call_operand.vmem [shape: f32[4,1], index: 2, kind: input, shape index: {}]
  %s3 = inlined_call_operand.vmem [shape: f32[4,1], index: 3, kind: input, shape index: {}]
  %s4 = inlined_call_operand.vmem [shape: f32[4,1], index: 4, kind: input, shape index: {}]
  %s5 = inlined_call_operand.hbm [shape: f32[2,4,16], index: 5, kind: output, shape index: {}]
  %s6 = sld [smem:[#allocation0]]
  $region53: #{discriminator_block.3} parent=0
    _
  %s8 = ssub.s32 1, %s6
  %s9 = scalar_select 0, %s8, %s6
  $region1: #{discriminator_block.3} parent=0
    #allocation2 [shape = 'u8[4096]{0}', space=vmem, size = 0x1000, scoped, tag = 'output window, operand 0']
    #allocation3 [shape = 's32[2]{0}', space=sflag, size = 0x8, scoped, tag = 'scoped memory for discriminator_block.3']
    %10 = vsyncpa [#allocation3], 0
    %s11 = scalar_lea.sflag [#allocation3], 1
    %12 = vsyncpa %s11, 0
    loop: start=0, step=1, limit=4
    $region2: #{discriminator_block.3} parent=1 // loop_pre_header
      _
    $region3: #{discriminator_block.3} parent=1 // loop_header
      %s14 = sphi 0, %s18
      %p15 = scmp.ge.s32.totalorder %s14, 4
      %s24 = sphi 0, %s26
      %s27 = sphi 0, %s24
      %s28 = sphi 0, %s27
      %s44 = sphi 0, %s28
      %s48 = sphi 0, %s48
      %s50 = sphi 0, %s48
      %s51 = sphi 0, %s50
      %s65 = sphi 0, %s51
      %s69 = sphi 0, %s69
      %s71 = sphi 0, %s69
      %s72 = sphi 0, %s71
      %s86 = sphi 0, %s72
      %s90 = sphi 0, %s90
      %s92 = sphi 0, %s90
      %s93 = sphi 0, %s92
      %s107 = sphi 0, %s93
      %s111 = sphi 0, %s111
      %s113 = sphi 0, %s111
      %s114 = sphi 0, %s113
      %s128 = sphi 0, %s114
      %s134 = sphi 0, %s136
      %s137 = sphi 0, %s134
      %s138 = sphi 0, %s137
      %s154 = sphi 0, %s138
    $region4: #{discriminator_block.3} parent=1 // loop_header_branch
      %17 = sbr.rel (%p15) target = $region8
    $region5: #{discriminator_block.3} parent=1 // loop_body
      %s19 = ssub.s32 %s14, 1
      %s20 = ssub.s32 %s14, 2
      %s21 = sadd.s32 %s14, 1
      %s22 = ssub.s32 %s14, %s21
      %p23 = scmp.eq.s32.totalorder %s22, 0
      %s25 = sadd.s32 %s24, 1
      %s26 = scalar_select %p23, %s24, %s25
      %p29 = pneg %p23
      %p30 = scmp.eq.s32.totalorder %s14, 1
      %p31 = por %p29, %p30
      %p32 = scmp.ne.s32.totalorder %s24, %s27
      %p33 = scmp.eq.s32.totalorder %s14, 0
      %p34 = por %p32, %p33
      %p35 = scmp.ne.s32.totalorder %s24, %s27
      %p36 = scmp.eq.s32.totalorder %s19, 1
      %p37 = por %p35, %p36
      %p38 = scmp.ne.s32.totalorder %s27, %s28
      %p39 = scmp.eq.s32.totalorder %s19, 0
      %p40 = por %p38, %p39
      %p41 = scmp.ne.s32.totalorder %s27, %s28
      %p42 = scmp.eq.s32.totalorder %s20, 1
      %p43 = por %p41, %p42
      %p45 = scmp.ne.s32.totalorder %s28, %s44
      %p46 = scmp.eq.s32.totalorder %s20, 0
      %p47 = por %p45, %p46
      %s49 = sadd.s32 %s48, 1
      %p52 = scmp.eq.s32.totalorder %s14, 1
      %p53 = scmp.ne.s32.totalorder %s48, %s50
      %p54 = scmp.eq.s32.totalorder %s14, 0
      %p55 = por %p53, %p54
      %p56 = scmp.ne.s32.totalorder %s48, %s50
      %p57 = scmp.eq.s32.totalorder %s19, 1
      %p58 = por %p56, %p57
      %p59 = scmp.ne.s32.totalorder %s50, %s51
      %p60 = scmp.eq.s32.totalorder %s19, 0
      %p61 = por %p59, %p60
      %p62 = scmp.ne.s32.totalorder %s50, %s51
      %p63 = scmp.eq.s32.totalorder %s20, 1
      %p64 = por %p62, %p63
      %p66 = scmp.ne.s32.totalorder %s51, %s65
      %p67 = scmp.eq.s32.totalorder %s20, 0
      %p68 = por %p66, %p67
      %s70 = sadd.s32 %s69, 1
      %p73 = scmp.eq.s32.totalorder %s14, 1
      %p74 = scmp.ne.s32.totalorder %s69, %s71
      %p75 = scmp.eq.s32.totalorder %s14, 0
      %p76 = por %p74, %p75
      %p77 = scmp.ne.s32.totalorder %s69, %s71
      %p78 = scmp.eq.s32.totalorder %s19, 1
      %p79 = por %p77, %p78
      %p80 = scmp.ne.s32.totalorder %s71, %s72
      %p81 = scmp.eq.s32.totalorder %s19, 0
      %p82 = por %p80, %p81
      %p83 = scmp.ne.s32.totalorder %s71, %s72
      %p84 = scmp.eq.s32.totalorder %s20, 1
      %p85 = por %p83, %p84
      %p87 = scmp.ne.s32.totalorder %s72, %s86
      %p88 = scmp.eq.s32.totalorder %s20, 0
      %p89 = por %p87, %p88
      %s91 = sadd.s32 %s90, 1
      %p94 = scmp.eq.s32.totalorder %s14, 1
      %p95 = scmp.ne.s32.totalorder %s90, %s92
      %p96 = scmp.eq.s32.totalorder %s14, 0
      %p97 = por %p95, %p96
      %p98 = scmp.ne.s32.totalorder %s90, %s92
      %p99 = scmp.eq.s32.totalorder %s19, 1
      %p100 = por %p98, %p99
      %p101 = scmp.ne.s32.totalorder %s92, %s93
      %p102 = scmp.eq.s32.totalorder %s19, 0
      %p103 = por %p101, %p102
      %p104 = scmp.ne.s32.totalorder %s92, %s93
      %p105 = scmp.eq.s32.totalorder %s20, 1
      %p106 = por %p104, %p105
      %p108 = scmp.ne.s32.totalorder %s93, %s107
      %p109 = scmp.eq.s32.totalorder %s20, 0
      %p110 = por %p108, %p109
      %s112 = sadd.s32 %s111, 1
      %p115 = scmp.eq.s32.totalorder %s14, 1
      %p116 = scmp.ne.s32.totalorder %s111, %s113
      %p117 = scmp.eq.s32.totalorder %s14, 0
      %p118 = por %p116, %p117
      %p119 = scmp.ne.s32.totalorder %s111, %s113
      %p120 = scmp.eq.s32.totalorder %s19, 1
      %p121 = por %p119, %p120
      %p122 = scmp.ne.s32.totalorder %s113, %s114
      %p123 = scmp.eq.s32.totalorder %s19, 0
      %p124 = por %p122, %p123
      %p125 = scmp.ne.s32.totalorder %s113, %s114
      %p126 = scmp.eq.s32.totalorder %s20, 1
      %p127 = por %p125, %p126
      %p129 = scmp.ne.s32.totalorder %s114, %s128
      %p130 = scmp.eq.s32.totalorder %s20, 0
      %p131 = por %p129, %p130
      %s132 = ssub.s32 %s14, %s21
      %p133 = scmp.eq.s32.totalorder %s132, 0
      %s135 = sadd.s32 %s134, 1
      %s136 = scalar_select %p133, %s134, %s135
      %p139 = pneg %p133
      %p140 = scmp.eq.s32.totalorder %s14, 1
      %p141 = por %p139, %p140
      %p142 = scmp.ne.s32.totalorder %s134, %s137
      %p143 = scmp.eq.s32.totalorder %s14, 0
      %p144 = por %p142, %p143
      %p145 = scmp.ne.s32.totalorder %s134, %s137
      %p146 = scmp.eq.s32.totalorder %s19, 1
      %p147 = por %p145, %p146
      %p148 = scmp.ne.s32.totalorder %s137, %s138
      %p149 = scmp.eq.s32.totalorder %s19, 0
      %p150 = por %p148, %p149
      %p151 = scmp.ne.s32.totalorder %s137, %s138
      %p152 = scmp.eq.s32.totalorder %s20, 1
      %p153 = por %p151, %p152
      %p155 = scmp.ne.s32.totalorder %s138, %s154
      %p156 = scmp.eq.s32.totalorder %s20, 0
      %p157 = por %p155, %p156
      %p158 = scmp.le.s32.totalorder 1, %s14
      %p159 = scmp.lt.s32.totalorder %s14, 3
      %p160 = pnand %p158, %p159
      %p161 = pneg %p160
      // Predicated region
      $region9: #{discriminator_block.3} parent=5 // pred_check
        _
      $region10: #{discriminator_block.3} parent=5 // pred_check_branch
        %163 = sbr.rel (%p160) target = $region12
      $region11: #{discriminator_block.3} parent=5 // pred_region
        %s164 = ssub.s32 %s14, 1
        // Predicated region
        $region13: #{discriminator_block.3} parent=11 // pred_check
          %p165 = pneg %p61
        $region14: #{discriminator_block.3} parent=11 // pred_check_branch
          %167 = sbr.rel (%p165) target = $region16
        $region15: #{discriminator_block.3} parent=11 // pred_region
          _
        $region16: #{discriminator_block.3} parent=11 // pred_fallthru
          _
        // Predicated region
        $region17: #{discriminator_block.3} parent=11 // pred_check
          %p168 = pneg %p82
        $region18: #{discriminator_block.3} parent=11 // pred_check_branch
          %170 = sbr.rel (%p168) target = $region20
        $region19: #{discriminator_block.3} parent=11 // pred_region
          _
        $region20: #{discriminator_block.3} parent=11 // pred_fallthru
          _
        // Predicated region
        $region21: #{discriminator_block.3} parent=11 // pred_check
          %p171 = pneg %p103
        $region22: #{discriminator_block.3} parent=11 // pred_check_branch
          %173 = sbr.rel (%p171) target = $region24
        $region23: #{discriminator_block.3} parent=11 // pred_region
          _
        $region24: #{discriminator_block.3} parent=11 // pred_fallthru
          _
        // Predicated region
        $region25: #{discriminator_block.3} parent=11 // pred_check
          %p174 = pneg %p124
        $region26: #{discriminator_block.3} parent=11 // pred_check_branch
          %176 = sbr.rel (%p174) target = $region28
        $region27: #{discriminator_block.3} parent=11 // pred_region
          _
        $region28: #{discriminator_block.3} parent=11 // pred_fallthru
          _
      $region12: #{discriminator_block.3} parent=5 // pred_fallthru
        _
      %p177 = scmp.lt.s32.totalorder %s14, 2
      // Predicated region
      $region29: #{discriminator_block.3} parent=5 // pred_check
        %p178 = pneg %p177
      $region30: #{discriminator_block.3} parent=5 // pred_check_branch
        %180 = sbr.rel (%p178) target = $region32
      $region31: #{discriminator_block.3} parent=5 // pred_region
        // Predicated region
        $region33: #{discriminator_block.3} parent=31 // pred_check
          %p181 = pneg %p34
        $region34: #{discriminator_block.3} parent=31 // pred_check_branch
          %183 = sbr.rel (%p181) target = $region36
        $region35: #{discriminator_block.3} parent=31 // pred_region
          %p184 = scmp.lt.s32.totalorder %s14, 1
          %s185 = scalar_select %p184, %s14, 1
          %s186 = smul.addr %s185, 4
          %s187 = scalar_lea.vmem %s0, %s186
        $region36: #{discriminator_block.3} parent=31 // pred_fallthru
          _
      $region32: #{discriminator_block.3} parent=5 // pred_fallthru
        _
      %p188 = scmp.le.s32.totalorder 1, %s14
      %p189 = scmp.lt.s32.totalorder %s14, 3
      %p190 = pnand %p188, %p189
      %p191 = pneg %p190
      // Predicated region
      $region37: #{discriminator_block.3} parent=5 // pred_check
        _
      $region38: #{discriminator_block.3} parent=5 // pred_check_branch
        %193 = sbr.rel (%p190) target = $region40
      $region39: #{discriminator_block.3} parent=5 // pred_region
        %s194 = ssub.s32 %s14, 1
        %p195 = scmp.lt.s32.totalorder %s19, 1
        %s196 = scalar_select %p195, %s19, 1
        %s197 = smul.addr %s196, 4
        %s198 = scalar_lea.vmem %s0, %s197
        %p199 = pneg %p40
        %p200 = pneg %p37
        %p201 = pneg %p61
        %p202 = pneg %p58
        %p203 = pneg %p82
        %p204 = pneg %p79
        %p205 = pneg %p103
        %p206 = pneg %p100
        %p207 = pneg %p124
        %p208 = pneg %p121
        %p209 = pneg %p150
        %p210 = pneg %p147
        %s211 = sand.u32 %s137, 1
        %s212 = scalar_lea.sflag [#allocation3], %s211
        %s213 = sand.u32 %s137, 1
        %s214 = smul.addr %s213, 4
        %s215 = scalar_lea.vmem [#allocation2], %s214
        %p216 = scmp.lt.s32.totalorder %s19, 1
        %s217 = scalar_select %p216, %s19, 1
        %s218 = smul.addr %s217, 4
        %s219 = scalar_lea.vmem %s0, %s218
        %v220 = vld [vmem:[%s219] sm:$0xf]
        %v221 = vlaneseq
        %v222 = vand.u32 %v221, 127
        %vm223 = vcmask 1047680
        %224 = vrot.lane.b32.xlu0 %v220, 16
        %v225 = vpop.permute.xlu0 %224
        %v226 = vsel %vm223, %v225, %v220
        %227 = vrot.lane.b32.xlu0 %v226, 16
        %v228 = vpop.permute.xlu0 %227
        %v229 = vsel %vm223, %v228, %v220
        %v230 = vadd.s32 %v222, 4294967295
        %vm231 = vcmp.ge.s32.totalorder %v230, 0
        %vm232 = vcmp.lt.s32.totalorder %v230, 16
        %vm233 = vmand %vm231, %vm232
        %235 = vrot.lane.b32.xlu0 %v229, 113
        %v236 = vpop.permute.xlu0 %235
        %v238 = vsel %vm233, %v236, 0.0
        %v239 = vld [vmem:[%s1] sm:$0xf]
        %241 = vset.pattern.permute.xlu0 0
        %242 = vperm.xlu0 %241, %v239
        %v243 = vpop.permute.xlu0 %242
        %v245 = vlaneseq
        %v246 = vshrl.u32 %v245, 7
        %v247 = vsub.s32 0, %v246
        %v248 = vrot.slane %v238, %v247
        %v249 = vmul.f32 %v243, %v248
        %v250 = vadd.f32 %v249, 0.0
        %251 = vset.pattern.permute.xlu0 1
        %252 = vperm.xlu0 %251, %v239
        %v253 = vpop.permute.xlu0 %252
        %v255 = vlaneseq
        %v256 = vshrl.u32 %v255, 7
        %v257 = vsub.s32 1, %v256
        %v258 = vrot.slane %v238, %v257
        %v259 = vmul.f32 %v253, %v258
        %v260 = vadd.f32 %v250, %v259
        %261 = vset.pattern.permute.xlu0 2
        %262 = vperm.xlu0 %261, %v239
        %v263 = vpop.permute.xlu0 %262
        %v265 = vlaneseq
        %v266 = vshrl.u32 %v265, 7
        %v267 = vsub.s32 2, %v266
        %v268 = vrot.slane %v238, %v267
        %v269 = vmul.f32 %v263, %v268
        %v270 = vadd.f32 %v260, %v269
        %271 = vset.pattern.permute.xlu0 3
        %272 = vperm.xlu0 %271, %v239
        %v273 = vpop.permute.xlu0 %272
        %v275 = vlaneseq
        %v276 = vshrl.u32 %v275, 7
        %v277 = vsub.s32 3, %v276
        %v278 = vrot.slane %v238, %v277
        %v279 = vmul.f32 %v273, %v278
        %v280 = vadd.f32 %v270, %v279
        %281 = vset.pattern.permute.xlu0 4
        %282 = vperm.xlu0 %281, %v239
        %v283 = vpop.permute.xlu0 %282
        %v285 = vlaneseq
        %v286 = vshrl.u32 %v285, 7
        %v287 = vsub.s32 0, %v286
        %v288 = vrot.slane %v220, %v287
        %v289 = vmul.f32 %v283, %v288
        %v290 = vadd.f32 %v280, %v289
        %291 = vset.pattern.permute.xlu0 5
        %292 = vperm.xlu0 %291, %v239
        %v293 = vpop.permute.xlu0 %292
        %v295 = vlaneseq
        %v296 = vshrl.u32 %v295, 7
        %v297 = vsub.s32 1, %v296
        %v298 = vrot.slane %v220, %v297
        %v299 = vmul.f32 %v293, %v298
        %v300 = vadd.f32 %v290, %v299
        %301 = vset.pattern.permute.xlu0 6
        %302 = vperm.xlu0 %301, %v239
        %v303 = vpop.permute.xlu0 %302
        %v305 = vlaneseq
        %v306 = vshrl.u32 %v305, 7
        %v307 = vsub.s32 2, %v306
        %v308 = vrot.slane %v220, %v307
        %v309 = vmul.f32 %v303, %v308
        %v310 = vadd.f32 %v300, %v309
        %311 = vset.pattern.permute.xlu0 7
        %312 = vperm.xlu0 %311, %v239
        %v313 = vpop.permute.xlu0 %312
        %v315 = vlaneseq
        %v316 = vshrl.u32 %v315, 7
        %v317 = vsub.s32 3, %v316
        %v318 = vrot.slane %v220, %v317
        %v319 = vmul.f32 %v313, %v318
        %v320 = vadd.f32 %v310, %v319
        %v321 = vadd.s32 %v222, 1
        %vm322 = vcmp.ge.s32.totalorder %v321, 0
        %vm323 = vcmp.lt.s32.totalorder %v321, 16
        %vm324 = vmand %vm322, %vm323
        %325 = vrot.lane.b32.xlu0 %v229, 127
        %v326 = vpop.permute.xlu0 %325
        %v328 = vsel %vm324, %v326, 0.0
        %329 = vset.pattern.permute.xlu0 8
        %330 = vperm.xlu0 %329, %v239
        %v331 = vpop.permute.xlu0 %330
        %v333 = vlaneseq
        %v334 = vshrl.u32 %v333, 7
        %v335 = vsub.s32 0, %v334
        %v336 = vrot.slane %v328, %v335
        %v337 = vmul.f32 %v331, %v336
        %v338 = vadd.f32 %v320, %v337
        %339 = vset.pattern.permute.xlu0 9
        %340 = vperm.xlu0 %339, %v239
        %v341 = vpop.permute.xlu0 %340
        %v343 = vlaneseq
        %v344 = vshrl.u32 %v343, 7
        %v345 = vsub.s32 1, %v344
        %v346 = vrot.slane %v328, %v345
        %v347 = vmul.f32 %v341, %v346
        %v348 = vadd.f32 %v338, %v347
        %349 = vset.pattern.permute.xlu0 10
        %350 = vperm.xlu0 %349, %v239
        %v351 = vpop.permute.xlu0 %350
        %v353 = vlaneseq
        %v354 = vshrl.u32 %v353, 7
        %v355 = vsub.s32 2, %v354
        %v356 = vrot.slane %v328, %v355
        %v357 = vmul.f32 %v351, %v356
        %v358 = vadd.f32 %v348, %v357
        %359 = vset.pattern.permute.xlu0 11
        %360 = vperm.xlu0 %359, %v239
        %v361 = vpop.permute.xlu0 %360
        %v363 = vlaneseq
        %v364 = vshrl.u32 %v363, 7
        %v365 = vsub.s32 3, %v364
        %v366 = vrot.slane %v328, %v365
        %v367 = vmul.f32 %v361, %v366
        %v368 = vadd.f32 %v358, %v367
        %v369 = vld [vmem:[%s2] sm:$0xf]
        %371 = vset.pattern.permute.xlu0 0
        %372 = vperm.xlu0 %371, %v369
        %v373 = vpop.permute.xlu0 %372
        %v375 = vadd.f32 %v368, %v373
        %vm376 = vcmp.gt.f32.partialorder %v375, 0.0
        %v377 = vmul.f32 %v375, 0.2
        %v378 = vsel %vm376, %v375, %v377
        %v379 = vld [vmem:[%s3] sm:$0xf]
        %381 = vset.pattern.permute.xlu0 0
        %382 = vperm.xlu0 %381, %v379
        %v383 = vpop.permute.xlu0 %382
        %v385 = vmul.f32 %v378, %v383
        %v386 = vadd.f32 %v220, %v385
        %v387 = vld [vmem:[%s4] sm:$0xf]
        %389 = vset.pattern.permute.xlu0 0
        %390 = vperm.xlu0 %389, %v387
        %v391 = vpop.permute.xlu0 %390
        %v393 = vadd.f32 %v386, %v391
        %vm394 = vcmask 125952
        %395 = vst.msk [vmem:[%s215] sm:$0xf] %vm394, %v393
        %s396 = sand.u32 %s137, 1
        %s397 = scalar_lea.sflag [#allocation3], %s396
        %s398 = sand.u32 %s137, 1
        %s399 = smul.addr %s398, 4
        %s400 = scalar_lea.vmem [#allocation2], %s399
        // Predicated region
        $region41: #{discriminator_block.3} parent=39 // pred_check
          %p401 = pneg %p147
        $region42: #{discriminator_block.3} parent=39 // pred_check_branch
          %403 = sbr.rel (%p401) target = $region44
        $region43: #{discriminator_block.3} parent=39 // pred_region
          %s405 = ssub.s32 64, 64
          %406 = vsyncadd %s397, %s405
          %s407 = smul.addr %s19, 64
          %s408 = scalar_lea.hbm %s5, %s407
          %s410 = sshll.u32 %s400, 4
          %s411 = int_to_ptr.vmem [resolvable:$true] %s410
          %413 = dma.vmem_to_hbm [thread:$0]  %s411, 64, %s408, %s397
        $region44: #{discriminator_block.3} parent=39 // pred_fallthru
          _
      $region40: #{discriminator_block.3} parent=5 // pred_fallthru
        _
      %p414 = scmp.le.s32.totalorder 2, %s14
      // Predicated region
      $region45: #{discriminator_block.3} parent=5 // pred_check
        %p415 = pneg %p414
      $region46: #{discriminator_block.3} parent=5 // pred_check_branch
        %417 = sbr.rel (%p415) target = $region48
      $region47: #{discriminator_block.3} parent=5 // pred_region
        %s418 = ssub.s32 %s14, 2
        // Predicated region
        $region49: #{discriminator_block.3} parent=47 // pred_check
          %p419 = pneg %p153
        $region50: #{discriminator_block.3} parent=47 // pred_check_branch
          %421 = sbr.rel (%p419) target = $region52
        $region51: #{discriminator_block.3} parent=47 // pred_region
          %s422 = sand.u32 %s138, 1
          %s423 = scalar_lea.sflag [#allocation3], %s422
          %s424 = sand.u32 %s138, 1
          %s425 = smul.addr %s424, 4
          %s426 = scalar_lea.vmem [#allocation2], %s425
          %427 = dma.done %s423, 64
        $region52: #{discriminator_block.3} parent=47 // pred_fallthru
          _
      $region48: #{discriminator_block.3} parent=5 // pred_fallthru
        _
    $region6: #{discriminator_block.3} parent=1 // loop_footer
      %s18 = sadd.s32 1, %s14
    $region7: #{discriminator_block.3} parent=1 // loop_footer_branch
      %13 = sbr.rel target = $region3
    $region8: #{discriminator_block.3} parent=1 // loop_exit
      _
    %428 = vsyncpa [#allocation3], 1
    %s429 = scalar_lea.sflag [#allocation3], 1
    %430 = vsyncpa %s429, 1

</llo_original>
